<compile_context>
chip_gen: v6e
topology: v6e:2x2x1
jax: 0.10.0
libtpu: 0.0.40
codegen_flags: <defaults>
</compile_context>

<pallas_src>
import functools
import math

import jax
import jax.numpy as jnp
from jax.experimental import pallas as pl
from jax.experimental.pallas import tpu as pltpu

KS = 7          # conv kernel size
PAD = KS // 2   # "same" padding


def _conv_operator(conv_weight, H, W, dtype=jnp.bfloat16):
    """Fold Conv2d(2, 1, 7, padding=3, bias=False) into one (2*H*W, H*W) matrix.

    Rows [0, HW) act on the channel-mean map, rows [HW, 2*HW) on the channel-max map,
    so that  concat([avg, max], axis=-1) @ M  ==  conv7x7_same([avg ; max]).
    Built once from the (1, 2, 7, 7) OIHW weight; data independent.
    """
    w = conv_weight.reshape(2, KS, KS).astype(jnp.float32)           # (2, 7, 7)
    hi = jnp.arange(H)
    wi = jnp.arange(W)
    dy = hi[:, None] - hi[None, :] + PAD                             # dy[h_in, h_out]
    dx = wi[:, None] - wi[None, :] + PAD                             # dx[w_in, w_out]
    vy = (dy >= 0) & (dy < KS)
    vx = (dx >= 0) & (dx < KS)
    dy_c = jnp.clip(dy, 0, KS - 1)
    dx_c = jnp.clip(dx, 0, KS - 1)
    # gathered[c, h_in, w_in, h_out, w_out] = w[c, h_in-h_out+PAD, w_in-w_out+PAD]
    gathered = w[:, dy_c[:, None, :, None], dx_c[None, :, None, :]]  # (2, H, W, H, W)
    mask = (vy[:, None, :, None] & vx[None, :, None, :]).astype(jnp.float32)
    m = (gathered * mask[None]).reshape(2 * H * W, H * W)            # [avg ; max] rows
    return m.astype(dtype)


def spatial_attention_kernel(m_ref, x_ref, o_ref, *, flag, precision):
    # m_ref: VMEM (2*HW, HW)   fused conv-as-matmul operator ([avg ; max] rows)
    # x_ref: VMEM (bt, C, HW)  lane-dense input block (HW is a multiple of 128)
    # o_ref: VMEM (bt, C, HW) if flag else (bt, HW)
    x = x_ref[...]
    xf = x.astype(jnp.float32)                        # (bt, C, HW)
    inv_c = jnp.float32(1.0 / x.shape[1])
    avg = jnp.sum(xf, axis=1) * inv_c                 # (bt, HW)  sublane reduce
    mx = jnp.max(xf, axis=1)                          # (bt, HW)  sublane reduce

    # One fused MXU matmul: LHS = [avg ; max] concatenated along K, RHS = stacked
    # Toeplitz operator.  f32 accumulation via preferred_element_type.
    dt = m_ref.dtype
    lhs = jnp.concatenate([avg.astype(dt), mx.astype(dt)], axis=-1)  # (bt, 2*HW)
    conv = jnp.dot(lhs, m_ref[...], preferred_element_type=jnp.float32,
                   precision=precision)               # (bt, HW)
    attn = jax.nn.sigmoid(conv)                       # EUP, f32

    if flag:
        # Gate in f32 (v5e has no bf16 VALU); single cast at the store.
        o_ref[...] = (attn[:, None, :] * xf).astype(o_ref.dtype)
    else:
        o_ref[...] = attn.astype(o_ref.dtype)         # lane-dense 2-D store


def _pick_batch_block(B, C, HW, itemsize, sublane_aligned):
    """Largest batch block: >= 8 LHS rows where possible, ~2 MiB x-blocks target."""
    per_item = max(C * HW * itemsize, 1)
    cap = max(8, (2 * 1024 * 1024) // per_item)
    if B <= cap:
        return B                                  # block dim == array dim: always legal
    cands = [d for d in range(1, B) if B % d == 0 and d <= cap
             and (not sublane_aligned or d % 8 == 0)]
    return max(cands) if cands else B


def spatial_attention(x, conv_weight, flag=True, batch_block=None,
                      conv_dtype=jnp.bfloat16, precision=None):
    """x: (B, C, H, W) NCHW; conv_weight: (1, 2, 7, 7) OIHW.

    Matches the PyTorch forward:  sigmoid(Conv7x7([mean_c(x); max_c(x)])) * x
    (or just the attention map if flag=False).

    conv_dtype / precision control the conv-as-matmul path:
      * bf16 + default precision (default): 1 MXU pass, half the operator VMEM.
      * f32  + Precision.HIGHEST          : matches the f32 reference to ~1e-4.
    """
    B, C, H, W = x.shape
    HW = H * W
    # TODO(synk): lane-pad HW and zero-pad the operator rows for arbitrary spatial sizes.
    assert HW % 128 == 0, "flattened spatial dim must be lane-aligned (multiple of 128)"

    if batch_block is None:
        batch_block = _pick_batch_block(B, C, HW, x.dtype.itemsize,
                                        sublane_aligned=not flag)
    bt = batch_block
    assert B % bt == 0
    # NOTE(v7x): with 2 TensorCores, keep bt <= B // 2 for large B so both cores get
    # grid steps; at the tiny demo batch we prefer the single fattest block instead.

    m = _conv_operator(conv_weight, H, W, dtype=conv_dtype)   # (2*HW, HW)
    x_flat = x.reshape(B, C, HW)                              # lane-dense, free reshape

    kernel = functools.partial(spatial_attention_kernel, flag=flag, precision=precision)
    if flag:
        out_shape = jax.ShapeDtypeStruct((B, C, HW), x.dtype)
        out_spec = pl.BlockSpec((bt, C, HW), lambda b: (b, 0, 0))
        out_block_elems = bt * C * HW
    else:
        # 2-D lane-dense attention map (unmasked vst); reshaped to (B,1,H,W) below.
        out_shape = jax.ShapeDtypeStruct((B, HW), x.dtype)
        out_spec = pl.BlockSpec((bt, HW), lambda b: (b, 0))
        out_block_elems = bt * HW

    def run(single_buffer_op):
        if single_buffer_op:
            # Constant block index -> one DMA and a single VMEM buffer for the operator.
            op_spec = pl.BlockSpec((2 * HW, HW), lambda b: (0, 0),
                                   pipeline_mode=pl.Buffered(1))
            op_bufs = 1
        else:
            op_spec = pl.BlockSpec((2 * HW, HW), lambda b: (0, 0))
            op_bufs = 2

        # Explicit VMEM budget: operator buffers + double-buffered in/out blocks.
        budget = (op_bufs * 2 * HW * HW * m.dtype.itemsize
                  + 2 * bt * C * HW * x.dtype.itemsize
                  + 2 * out_block_elems * x.dtype.itemsize)
        vmem_limit = int(min(100 * 2**20, max(32 * 2**20, 2 * budget)))

        return pl.pallas_call(
            kernel,
            out_shape=out_shape,
            grid=(B // bt,),
            in_specs=[op_spec,
                      pl.BlockSpec((bt, C, HW), lambda b: (b, 0, 0))],
            out_specs=out_spec,
            compiler_params=pltpu.CompilerParams(
                dimension_semantics=("parallel",),
                vmem_limit_bytes=vmem_limit),
        )(m, x_flat)

    try:
        out_flat = run(True)
    except Exception:
        # pl.Buffered(1) not accepted by this jax build -> default double buffering.
        out_flat = run(False)

    if flag:
        return out_flat.reshape(B, C, H, W)
    return out_flat.reshape(B, 1, H, W)


def reference(x, conv_weight, flag=True, conv_dtype=jnp.float32):
    """Pure-JAX reference matching the PyTorch forward (optionally bf16 conv inputs)."""
    avg = jnp.mean(x, axis=1, keepdims=True)
    mx = jnp.max(x, axis=1, keepdims=True)
    cat = jnp.concatenate([avg, mx], axis=1).astype(conv_dtype)
    out = jax.lax.conv_general_dilated(
        cat, conv_weight.astype(conv_dtype), window_strides=(1, 1),
        padding=[(PAD, PAD), (PAD, PAD)],
        dimension_numbers=("NCHW", "OIHW", "NCHW"),
        preferred_element_type=jnp.float32,
        precision=jax.lax.Precision.HIGHEST)
    s = jax.nn.sigmoid(out)
    return s * x if flag else s


if __name__ == "__main__":
    key = jax.random.PRNGKey(0)
    kx, kw = jax.random.split(key)

    # Small shapes consistent with the module: batch=2, channels=4, 16x16 spatial.
    B, C, H, W = 2, 4, 16, 16
    x = jax.random.normal(kx, (B, C, H, W), dtype=jnp.float32)

    # Deterministic xavier_uniform init of conv.weight, shape (1, 2, 7, 7).
    fan_in = 2 * KS * KS
    fan_out = 1 * KS * KS
    bound = math.sqrt(6.0 / (fan_in + fan_out))
    conv_weight = jax.random.uniform(
        kw, (1, 2, KS, KS), minval=-bound, maxval=bound, dtype=jnp.float32)

    ref_f32 = reference(x, conv_weight, flag=True, conv_dtype=jnp.float32)
    ref_bf16 = reference(x, conv_weight, flag=True, conv_dtype=jnp.bfloat16)

    # --- default fast path: bf16 operator/maps, single MXU pass, f32 accumulate ----
    out = jax.block_until_ready(spatial_attention(x, conv_weight, flag=True))
    assert out.shape == (B, C, H, W)
    # vs a bf16-conv reference (identical rounding, f32 accumulation): tight tolerance.
    assert jnp.allclose(out, ref_bf16, rtol=2e-3, atol=2e-3), "bf16 path mismatch"
    # vs the exact f32 reference: looser tolerance = cost of the single bf16 MXU pass.
    assert jnp.allclose(out, ref_f32, rtol=3e-2, atol=3e-2), "bf16 vs f32 drift too large"

    out_map = jax.block_until_ready(spatial_attention(x, conv_weight, flag=False))
    ref_map_bf16 = reference(x, conv_weight, flag=False, conv_dtype=jnp.bfloat16)
    assert out_map.shape == ref_map_bf16.shape == (B, 1, H, W)
    assert jnp.allclose(out_map, ref_map_bf16, rtol=2e-3, atol=2e-3), "flag=False mismatch"

    # --- exact path: f32 operator/maps + HIGHEST matmul precision -------------------
    out_hi = jax.block_until_ready(
        spatial_attention(x, conv_weight, flag=True,
                          conv_dtype=jnp.float32,
                          precision=jax.lax.Precision.HIGHEST))
    assert jnp.allclose(out_hi, ref_f32, rtol=1e-4, atol=1e-4), "f32 path mismatch"

    out_map_hi = jax.block_until_ready(
        spatial_attention(x, conv_weight, flag=False,
                          conv_dtype=jnp.float32,
                          precision=jax.lax.Precision.HIGHEST))
    ref_map_f32 = reference(x, conv_weight, flag=False, conv_dtype=jnp.float32)
    assert jnp.allclose(out_map_hi, ref_map_f32, rtol=1e-4, atol=1e-4), "f32 map mismatch"

    print("KERNEL_OK")
</pallas_src>

<mosaic_0001>
module attributes {stable_mosaic.version = 11 : i64} {
  func.func @spatial_attention_kernel(%arg0: i32, %arg1: memref<512x256xbf16, #tpu.memory_space<vmem>>, %arg2: memref<2x4x256xf32, #tpu.memory_space<vmem>>, %arg3: memref<2x4x256xf32, #tpu.memory_space<vmem>>) attributes {dimension_semantics = [#tpu.dimension_semantics<parallel>], iteration_bounds = array<i64: 1>, scalar_prefetch = 0 : i64, scratch_operands = 0 : i64, tpu.core_type = #tpu.core_type<tc>, window_params = [{pipeline_mode = #tpu.pipeline_mode<synchronous>, transform_indices = @transform_0, window_bounds = array<i64: 512, 256>}, {transform_indices = @transform_1, window_bounds = array<i64: 2, 4, 256>}, {transform_indices = @transform_2, window_bounds = array<i64: 2, 4, 256>}]} {
    %c0 = arith.constant 0 : index
    %c0_0 = arith.constant 0 : index
    %c0_1 = arith.constant 0 : index
    %0 = vector.load %arg2[%c0, %c0_0, %c0_1] : memref<2x4x256xf32, #tpu.memory_space<vmem>>, vector<2x4x256xf32>
    %cst = arith.constant dense<0.000000e+00> : vector<2x256xf32>
    %1 = vector.multi_reduction <add>, %0, %cst [1] : vector<2x4x256xf32> to vector<2x256xf32>
    %cst_2 = arith.constant 2.500000e-01 : f32
    %2 = vector.broadcast %cst_2 : f32 to vector<2x256xf32>
    %3 = arith.mulf %1, %2 : vector<2x256xf32>
    %cst_3 = arith.constant dense<0xFF800000> : vector<2x256xf32>
    %4 = vector.multi_reduction <maximumf>, %0, %cst_3 [1] : vector<2x4x256xf32> to vector<2x256xf32>
    %5 = arith.truncf %3 : vector<2x256xf32> to vector<2x256xbf16>
    %6 = arith.truncf %4 : vector<2x256xf32> to vector<2x256xbf16>
    %7 = tpu.concatenate %5, %6 in 1 : vector<2x256xbf16>, vector<2x256xbf16> -> vector<2x512xbf16>
    %c0_4 = arith.constant 0 : index
    %c0_5 = arith.constant 0 : index
    %8 = vector.load %arg1[%c0_4, %c0_5] : memref<512x256xbf16, #tpu.memory_space<vmem>>, vector<512x256xbf16>
    %cst_6 = arith.constant dense<0.000000e+00> : vector<2x256xf32>
    %9 = tpu.matmul %7, %8, %cst_6 {dimension_numbers = #tpu.dot_dimension_numbers<[1], [0], [0], [1], [0, 0, 1, 1], [], []>} : vector<2x512xbf16>, vector<512x256xbf16>, vector<2x256xf32> -> vector<2x256xf32>
    %10 = arith.negf %9 : vector<2x256xf32>
    %11 = math.exp %10 : vector<2x256xf32>
    %cst_7 = arith.constant 1.000000e+00 : f32
    %12 = vector.broadcast %cst_7 : f32 to vector<2x256xf32>
    %13 = arith.addf %12, %11 : vector<2x256xf32>
    %14 = arith.divf %12, %13 : vector<2x256xf32>
    %15 = vector.shape_cast %14 : vector<2x256xf32> to vector<2x1x256xf32>
    %16 = vector.broadcast %15 : vector<2x1x256xf32> to vector<2x4x256xf32>
    %17 = arith.mulf %16, %0 : vector<2x4x256xf32>
    %c0_8 = arith.constant 0 : index
    %c0_9 = arith.constant 0 : index
    %c0_10 = arith.constant 0 : index
    %18 = vector.load %arg3[%c0_8, %c0_9, %c0_10] : memref<2x4x256xf32, #tpu.memory_space<vmem>>, vector<2x4x256xf32>
    tpu.vector_store %arg3[%c0_8, %c0_9, %c0_10], %17 {strides = array<i32>} : memref<2x4x256xf32, #tpu.memory_space<vmem>>, vector<2x4x256xf32>,
    return
  }
  func.func @transform_0(%arg0: i32) -> (i32, i32) {
    %c0_i32 = arith.constant 0 : i32
    %c0_i32_0 = arith.constant 0 : i32
    %c0_i32_1 = arith.constant 0 : i32
    return %c0_i32, %c0_i32_0 : i32, i32
  }
  func.func @transform_1(%arg0: i32) -> (i32, i32, i32) {
    %c0_i32 = arith.constant 0 : i32
    %c0_i32_0 = arith.constant 0 : i32
    %c0_i32_1 = arith.constant 0 : i32
    return %arg0, %c0_i32, %c0_i32_0 : i32, i32, i32
  }
  func.func @transform_2(%arg0: i32) -> (i32, i32, i32) {
    %c0_i32 = arith.constant 0 : i32
    %c0_i32_0 = arith.constant 0 : i32
    %c0_i32_1 = arith.constant 0 : i32
    return %arg0, %c0_i32, %c0_i32_0 : i32, i32, i32
  }
}

module attributes {stable_mosaic.version = 11 : i64} {
  func.func @spatial_attention_kernel(%arg0: i32, %arg1: memref<512x256xbf16, #tpu.memory_space<vmem>>, %arg2: memref<2x4x256xf32, #tpu.memory_space<vmem>>, %arg3: memref<2x4x256xf32, #tpu.memory_space<vmem>>) attributes {dimension_semantics = [#tpu.dimension_semantics<parallel>], iteration_bounds = array<i64: 1>, scalar_prefetch = 0 : i64, scratch_operands = 0 : i64, tpu.core_type = #tpu.core_type<tc>, window_params = [{pipeline_mode = #tpu.pipeline_mode<synchronous>, transform_indices = @transform_0, window_bounds = array<i64: 512, 256>}, {transform_indices = @transform_1, window_bounds = array<i64: 2, 4, 256>}, {transform_indices = @transform_2, window_bounds = array<i64: 2, 4, 256>}]} {
    %c0 = arith.constant 0 : index
    %c0_0 = arith.constant 0 : index
    %c0_1 = arith.constant 0 : index
    %0 = vector.load %arg2[%c0, %c0_0, %c0_1] : memref<2x4x256xf32, #tpu.memory_space<vmem>>, vector<2x4x256xf32>
    %cst = arith.constant dense<0.000000e+00> : vector<2x256xf32>
    %1 = vector.multi_reduction <add>, %0, %cst [1] : vector<2x4x256xf32> to vector<2x256xf32>
    %cst_2 = arith.constant 2.500000e-01 : f32
    %2 = vector.broadcast %cst_2 : f32 to vector<2x256xf32>
    %3 = arith.mulf %1, %2 : vector<2x256xf32>
    %cst_3 = arith.constant dense<0xFF800000> : vector<2x256xf32>
    %4 = vector.multi_reduction <maximumf>, %0, %cst_3 [1] : vector<2x4x256xf32> to vector<2x256xf32>
    %5 = arith.truncf %3 : vector<2x256xf32> to vector<2x256xbf16>
    %6 = arith.truncf %4 : vector<2x256xf32> to vector<2x256xbf16>
    %7 = tpu.concatenate %5, %6 in 1 : vector<2x256xbf16>, vector<2x256xbf16> -> vector<2x512xbf16>
    %c0_4 = arith.constant 0 : index
    %c0_5 = arith.constant 0 : index
    %8 = vector.load %arg1[%c0_4, %c0_5] : memref<512x256xbf16, #tpu.memory_space<vmem>>, vector<512x256xbf16>
    %cst_6 = arith.constant dense<0.000000e+00> : vector<2x256xf32>
    %9 = tpu.matmul %7, %8, %cst_6 {dimension_numbers = #tpu.dot_dimension_numbers<[1], [0], [0], [1], [0, 0, 1, 1], [], []>} : vector<2x512xbf16>, vector<512x256xbf16>, vector<2x256xf32> -> vector<2x256xf32>
    %10 = arith.negf %9 : vector<2x256xf32>
    %11 = math.exp %10 : vector<2x256xf32>
    %cst_7 = arith.constant 1.000000e+00 : f32
    %12 = vector.broadcast %cst_7 : f32 to vector<2x256xf32>
    %13 = arith.addf %12, %11 : vector<2x256xf32>
    %14 = arith.divf %12, %13 : vector<2x256xf32>
    %15 = vector.shape_cast %14 : vector<2x256xf32> to vector<2x1x256xf32>
    %16 = vector.broadcast %15 : vector<2x1x256xf32> to vector<2x4x256xf32>
    %17 = arith.mulf %16, %0 : vector<2x4x256xf32>
    %c0_8 = arith.constant 0 : index
    %c0_9 = arith.constant 0 : index
    %c0_10 = arith.constant 0 : index
    %18 = vector.load %arg3[%c0_8, %c0_9, %c0_10] : memref<2x4x256xf32, #tpu.memory_space<vmem>>, vector<2x4x256xf32>
    tpu.vector_store %arg3[%c0_8, %c0_9, %c0_10], %17 {strides = array<i32>} : memref<2x4x256xf32, #tpu.memory_space<vmem>>, vector<2x4x256xf32>,
    return
  }
  func.func @transform_0(%arg0: i32) -> (i32, i32) {
    %c0_i32 = arith.constant 0 : i32
    %c0_i32_0 = arith.constant 0 : i32
    %c0_i32_1 = arith.constant 0 : i32
    return %c0_i32, %c0_i32_0 : i32, i32
  }
  func.func @transform_1(%arg0: i32) -> (i32, i32, i32) {
    %c0_i32 = arith.constant 0 : i32
    %c0_i32_0 = arith.constant 0 : i32
    %c0_i32_1 = arith.constant 0 : i32
    return %arg0, %c0_i32, %c0_i32_0 : i32, i32, i32
  }
  func.func @transform_2(%arg0: i32) -> (i32, i32, i32) {
    %c0_i32 = arith.constant 0 : i32
    %c0_i32_0 = arith.constant 0 : i32
    %c0_i32_1 = arith.constant 0 : i32
    return %arg0, %c0_i32, %c0_i32_0 : i32, i32, i32
  }
}

</mosaic_0001>

<llo_original>
// kernel: tpu_custom_call.1
$region0: #{tpu_custom_call.1}
  #allocation0 [shape = 'u32[]', space=smem, size = 0x4, offset = 0x4, fixed_abs, tag = 'smem constant byte address 0x4 - core index']
  #allocation1 [shape = 'u32[144,128]{1,0:T(1,128)}', space=vmem, size = 0x12000, scoped, tag = 'internal scratch']
  %s0 = inlined_call_operand.hbm [shape: bf16[512,256], index: 0, kind: input, shape index: {}]
  %s1 = inlined_call_operand.hbm [shape: f32[2,4,256], index: 1, kind: input, shape index: {}]
  %s2 = inlined_call_operand.hbm [shape: f32[2,4,256], index: 2, kind: output, shape index: {}]
  %s3 = sld [smem:[#allocation0]]
  $region26: #{tpu_custom_call.1} parent=0
    _
  %s5 = ssub.s32 1, %s3
  %s6 = scalar_select 0, %s5, %s3
  $region1: #{tpu_custom_call.1} parent=0
    #allocation2 [shape = 'u8[262144]{0}', space=vmem, size = 0x40000, scoped, tag = 'input window, operand 0, single buffered']
    #allocation3 [shape = 's32[1]{0}', space=sflag, size = 0x4, scoped, tag = 'scoped memory for tpu_custom_call.1']
    #allocation4 [shape = 's32[1]{0}', space=sflag, size = 0x4, scoped, tag = 'scoped memory for tpu_custom_call.1']
    #allocation5 [shape = 'u8[8192]{0}', space=vmem, size = 0x2000, scoped, tag = 'input window, operand 1, single buffered']
    #allocation6 [shape = 's32[1]{0}', space=sflag, size = 0x4, scoped, tag = 'scoped memory for tpu_custom_call.1']
    #allocation7 [shape = 'u8[8192]{0}', space=vmem, size = 0x2000, scoped, tag = 'output window, operand 0, single buffered']
    %7 = vsyncpa [#allocation3], 0
    %8 = vsyncpa [#allocation6], 0
    %9 = vsyncpa [#allocation4], 0
    // Predicated region
    $region2: #{tpu_custom_call.1} parent=1 // pred_check
      _
    $region3: #{tpu_custom_call.1} parent=1 // pred_check_branch
      %11 = sbr.rel (0) target = $region5
    $region4: #{tpu_custom_call.1} parent=1 // pred_region
      %s13 = ssub.s32 8192, 8192
      %14 = vsyncadd [#allocation3], %s13
      %s15 = sshll.u32 [#allocation2], 4
      %s16 = int_to_ptr.vmem [resolvable:$true] %s15
      %21 = dma.hbm_to_vmem [thread:$0]  %s0, 8192, %s16, [#allocation3], 128, 128, 8
    $region5: #{tpu_custom_call.1} parent=1 // pred_fallthru
      _
    // Predicated region
    $region6: #{tpu_custom_call.1} parent=1 // pred_check
      _
    $region7: #{tpu_custom_call.1} parent=1 // pred_check_branch
      %23 = sbr.rel (0) target = $region9
    $region8: #{tpu_custom_call.1} parent=1 // pred_region
      %s25 = ssub.s32 256, 256
      %26 = vsyncadd [#allocation6], %s25
      %s27 = sshll.u32 [#allocation5], 4
      %s28 = int_to_ptr.vmem [resolvable:$true] %s27
      %33 = dma.hbm_to_vmem [thread:$0]  %s1, 256, %s28, [#allocation6], 128, 128, 8
    $region9: #{tpu_custom_call.1} parent=1 // pred_fallthru
      _
    // Predicated region
    $region10: #{tpu_custom_call.1} parent=1 // pred_check
      _
    $region11: #{tpu_custom_call.1} parent=1 // pred_check_branch
      %35 = sbr.rel (0) target = $region13
    $region12: #{tpu_custom_call.1} parent=1 // pred_region
      %36 = dma.done [#allocation3], 8192
    $region13: #{tpu_custom_call.1} parent=1 // pred_fallthru
      _
    // Predicated region
    $region14: #{tpu_custom_call.1} parent=1 // pred_check
      _
    $region15: #{tpu_custom_call.1} parent=1 // pred_check_branch
      %38 = sbr.rel (0) target = $region17
    $region16: #{tpu_custom_call.1} parent=1 // pred_region
      %39 = dma.done [#allocation6], 256
    $region17: #{tpu_custom_call.1} parent=1 // pred_fallthru
      _
    %v40 = vld [vmem:[#allocation5] sm:$0xff]
    %v41 = vld [vmem:[#allocation5 + $0x8] sm:$0xff]
    %v44 = vcombine.high %v40, %v40
    %v45 = vcombine.high %v41, %v41
    %vm48 = vcmask 1043456
    %v49 = vsel %vm48, %v40, 0.0
    %v50 = vrot.slane %v49, 4
    %v51 = vadd.f32 %v49, %v50
    %v52 = vrot.slane %v51, 2
    %v53 = vadd.f32 %v51, %v52
    %v54 = vrot.slane %v53, 1
    %v55 = vadd.f32 %v53, %v54
    %v56 = vsel %vm48, %v44, 0.0
    %v57 = vrot.slane %v56, 4
    %v58 = vadd.f32 %v56, %v57
    %v59 = vrot.slane %v58, 2
    %v60 = vadd.f32 %v58, %v59
    %v61 = vrot.slane %v60, 1
    %v62 = vadd.f32 %v60, %v61
    %v63 = vsel %vm48, %v41, 0.0
    %v64 = vrot.slane %v63, 4
    %v65 = vadd.f32 %v63, %v64
    %v66 = vrot.slane %v65, 2
    %v67 = vadd.f32 %v65, %v66
    %v68 = vrot.slane %v67, 1
    %v69 = vadd.f32 %v67, %v68
    %v70 = vsel %vm48, %v45, 0.0
    %v71 = vrot.slane %v70, 4
    %v72 = vadd.f32 %v70, %v71
    %v73 = vrot.slane %v72, 2
    %v74 = vadd.f32 %v72, %v73
    %v75 = vrot.slane %v74, 1
    %v76 = vadd.f32 %v74, %v75
    %v77 = vmul.f32 %v55, 0.25
    %v78 = vmul.f32 %v62, 0.25
    %v79 = vmul.f32 %v69, 0.25
    %v80 = vmul.f32 %v76, 0.25
    %v81 = vsel %vm48, %v40, -inf
    %v82 = vrot.slane %v81, 4
    %v83 = vmax.f32 %v81, %v82
    %v84 = vrot.slane %v83, 2
    %v85 = vmax.f32 %v83, %v84
    %v86 = vrot.slane %v85, 1
    %v87 = vmax.f32 %v85, %v86
    %v88 = vsel %vm48, %v44, -inf
    %v89 = vrot.slane %v88, 4
    %v90 = vmax.f32 %v88, %v89
    %v91 = vrot.slane %v90, 2
    %v92 = vmax.f32 %v90, %v91
    %v93 = vrot.slane %v92, 1
    %v94 = vmax.f32 %v92, %v93
    %v95 = vsel %vm48, %v41, -inf
    %v96 = vrot.slane %v95, 4
    %v97 = vmax.f32 %v95, %v96
    %v98 = vrot.slane %v97, 2
    %v99 = vmax.f32 %v97, %v98
    %v100 = vrot.slane %v99, 1
    %v101 = vmax.f32 %v99, %v100
    %v102 = vsel %vm48, %v45, -inf
    %v103 = vrot.slane %v102, 4
    %v104 = vmax.f32 %v102, %v103
    %v105 = vrot.slane %v104, 2
    %v106 = vmax.f32 %v104, %v105
    %v107 = vrot.slane %v106, 1
    %v108 = vmax.f32 %v106, %v107
    %v109 = vpack.c.bf16 %v77, %v77
    %v110 = vpack.c.bf16 %v78, %v78
    %v111 = vpack.c.bf16 %v79, %v79
    %v112 = vpack.c.bf16 %v80, %v80
    %v113 = vpack.c.bf16 %v87, %v87
    %v114 = vpack.c.bf16 %v94, %v94
    %v115 = vpack.c.bf16 %v101, %v101
    %v116 = vpack.c.bf16 %v108, %v108
    %v121 = vunpack.c.l.b16 %v109
    %v122 = vunpack.c.l.b16 %v110
    %v123 = vunpack.c.l.b16 %v111
    %v124 = vunpack.c.l.b16 %v112
    %vm125 = vcmask 1041409
    %v126 = vsel %vm125, %v123, %v121
    %v127 = vsel %vm125, %v124, %v122
    %v128 = vpack.c.b16 %v126, %v126
    %v129 = vpack.c.b16 %v127, %v127
    %v136 = vunpack.c.l.b16 %v113
    %v137 = vunpack.c.l.b16 %v114
    %v138 = vunpack.c.l.b16 %v115
    %v139 = vunpack.c.l.b16 %v116
    %v140 = vsel %vm125, %v138, %v136
    %v141 = vsel %vm125, %v139, %v137
    %v142 = vpack.c.b16 %v140, %v140
    %v143 = vpack.c.b16 %v141, %v141
    %v146 = vld [vmem:[#allocation2] sm:$0xff]
    %v147 = vld [vmem:[#allocation2 + $0x8] sm:$0xff]
    %v148 = vld [vmem:[#allocation2 + $0x10] sm:$0xff]
    %v149 = vld [vmem:[#allocation2 + $0x18] sm:$0xff]
    %v150 = vld [vmem:[#allocation2 + $0x20] sm:$0xff]
    %v151 = vld [vmem:[#allocation2 + $0x28] sm:$0xff]
    %v152 = vld [vmem:[#allocation2 + $0x30] sm:$0xff]
    %v153 = vld [vmem:[#allocation2 + $0x38] sm:$0xff]
    %v154 = vld [vmem:[#allocation2 + $0x40] sm:$0xff]
    %v155 = vld [vmem:[#allocation2 + $0x48] sm:$0xff]
    %v156 = vld [vmem:[#allocation2 + $0x50] sm:$0xff]
    %v157 = vld [vmem:[#allocation2 + $0x58] sm:$0xff]
    %v158 = vld [vmem:[#allocation2 + $0x60] sm:$0xff]
    %v159 = vld [vmem:[#allocation2 + $0x68] sm:$0xff]
    %v160 = vld [vmem:[#allocation2 + $0x70] sm:$0xff]
    %v161 = vld [vmem:[#allocation2 + $0x78] sm:$0xff]
    %v162 = vld [vmem:[#allocation2 + $0x80] sm:$0xff]
    %v163 = vld [vmem:[#allocation2 + $0x88] sm:$0xff]
    %v164 = vld [vmem:[#allocation2 + $0x90] sm:$0xff]
    %v165 = vld [vmem:[#allocation2 + $0x98] sm:$0xff]
    %v166 = vld [vmem:[#allocation2 + $0xa0] sm:$0xff]
    %v167 = vld [vmem:[#allocation2 + $0xa8] sm:$0xff]
    %v168 = vld [vmem:[#allocation2 + $0xb0] sm:$0xff]
    %v169 = vld [vmem:[#allocation2 + $0xb8] sm:$0xff]
    %v170 = vld [vmem:[#allocation2 + $0xc0] sm:$0xff]
    %v171 = vld [vmem:[#allocation2 + $0xc8] sm:$0xff]
    %v172 = vld [vmem:[#allocation2 + $0xd0] sm:$0xff]
    %v173 = vld [vmem:[#allocation2 + $0xd8] sm:$0xff]
    %v174 = vld [vmem:[#allocation2 + $0xe0] sm:$0xff]
    %v175 = vld [vmem:[#allocation2 + $0xe8] sm:$0xff]
    %v176 = vld [vmem:[#allocation2 + $0xf0] sm:$0xff]
    %v177 = vld [vmem:[#allocation2 + $0xf8] sm:$0xff]
    %v178 = vld [vmem:[#allocation2 + $0x100] sm:$0xff]
    %v179 = vld [vmem:[#allocation2 + $0x108] sm:$0xff]
    %v180 = vld [vmem:[#allocation2 + $0x110] sm:$0xff]
    %v181 = vld [vmem:[#allocation2 + $0x118] sm:$0xff]
    %v182 = vld [vmem:[#allocation2 + $0x120] sm:$0xff]
    %v183 = vld [vmem:[#allocation2 + $0x128] sm:$0xff]
    %v184 = vld [vmem:[#allocation2 + $0x130] sm:$0xff]
    %v185 = vld [vmem:[#allocation2 + $0x138] sm:$0xff]
    %v186 = vld [vmem:[#allocation2 + $0x140] sm:$0xff]
    %v187 = vld [vmem:[#allocation2 + $0x148] sm:$0xff]
    %v188 = vld [vmem:[#allocation2 + $0x150] sm:$0xff]
    %v189 = vld [vmem:[#allocation2 + $0x158] sm:$0xff]
    %v190 = vld [vmem:[#allocation2 + $0x160] sm:$0xff]
    %v191 = vld [vmem:[#allocation2 + $0x168] sm:$0xff]
    %v192 = vld [vmem:[#allocation2 + $0x170] sm:$0xff]
    %v193 = vld [vmem:[#allocation2 + $0x178] sm:$0xff]
    %v194 = vld [vmem:[#allocation2 + $0x180] sm:$0xff]
    %v195 = vld [vmem:[#allocation2 + $0x188] sm:$0xff]
    %v196 = vld [vmem:[#allocation2 + $0x190] sm:$0xff]
    %v197 = vld [vmem:[#allocation2 + $0x198] sm:$0xff]
    %v198 = vld [vmem:[#allocation2 + $0x1a0] sm:$0xff]
    %v199 = vld [vmem:[#allocation2 + $0x1a8] sm:$0xff]
    %v200 = vld [vmem:[#allocation2 + $0x1b0] sm:$0xff]
    %v201 = vld [vmem:[#allocation2 + $0x1b8] sm:$0xff]
    %v202 = vld [vmem:[#allocation2 + $0x1c0] sm:$0xff]
    %v203 = vld [vmem:[#allocation2 + $0x1c8] sm:$0xff]
    %v204 = vld [vmem:[#allocation2 + $0x1d0] sm:$0xff]
    %v205 = vld [vmem:[#allocation2 + $0x1d8] sm:$0xff]
    %v206 = vld [vmem:[#allocation2 + $0x1e0] sm:$0xff]
    %v207 = vld [vmem:[#allocation2 + $0x1e8] sm:$0xff]
    %v208 = vld [vmem:[#allocation2 + $0x1f0] sm:$0xff]
    %v209 = vld [vmem:[#allocation2 + $0x1f8] sm:$0xff]
    %v274 = vunpack.c.l.b16 %v146
    %v275 = vunpack.c.h.b16 %v146
    %v276 = vunpack.c.l.b16 %v147
    %v277 = vunpack.c.h.b16 %v147
    %v278 = vunpack.c.l.b16 %v148
    %v279 = vunpack.c.h.b16 %v148
    %v280 = vunpack.c.l.b16 %v149
    %v281 = vunpack.c.h.b16 %v149
    %v282 = vunpack.c.l.b16 %v150
    %v283 = vunpack.c.h.b16 %v150
    %v284 = vunpack.c.l.b16 %v151
    %v285 = vunpack.c.h.b16 %v151
    %v286 = vunpack.c.l.b16 %v152
    %v287 = vunpack.c.h.b16 %v152
    %v288 = vunpack.c.l.b16 %v153
    %v289 = vunpack.c.h.b16 %v153
    %v290 = vunpack.c.l.b16 %v154
    %v291 = vunpack.c.h.b16 %v154
    %v292 = vunpack.c.l.b16 %v155
    %v293 = vunpack.c.h.b16 %v155
    %v294 = vunpack.c.l.b16 %v156
    %v295 = vunpack.c.h.b16 %v156
    %v296 = vunpack.c.l.b16 %v157
    %v297 = vunpack.c.h.b16 %v157
    %v298 = vunpack.c.l.b16 %v158
    %v299 = vunpack.c.h.b16 %v158
    %v300 = vunpack.c.l.b16 %v159
    %v301 = vunpack.c.h.b16 %v159
    %v302 = vunpack.c.l.b16 %v160
    %v303 = vunpack.c.h.b16 %v160
    %v304 = vunpack.c.l.b16 %v161
    %v305 = vunpack.c.h.b16 %v161
    %v306 = vunpack.c.l.b16 %v162
    %v307 = vunpack.c.h.b16 %v162
    %v308 = vunpack.c.l.b16 %v163
    %v309 = vunpack.c.h.b16 %v163
    %v310 = vunpack.c.l.b16 %v164
    %v311 = vunpack.c.h.b16 %v164
    %v312 = vunpack.c.l.b16 %v165
    %v313 = vunpack.c.h.b16 %v165
    %v314 = vunpack.c.l.b16 %v166
    %v315 = vunpack.c.h.b16 %v166
    %v316 = vunpack.c.l.b16 %v167
    %v317 = vunpack.c.h.b16 %v167
    %v318 = vunpack.c.l.b16 %v168
    %v319 = vunpack.c.h.b16 %v168
    %v320 = vunpack.c.l.b16 %v169
    %v321 = vunpack.c.h.b16 %v169
    %v322 = vunpack.c.l.b16 %v170
    %v323 = vunpack.c.h.b16 %v170
    %v324 = vunpack.c.l.b16 %v171
    %v325 = vunpack.c.h.b16 %v171
    %v326 = vunpack.c.l.b16 %v172
    %v327 = vunpack.c.h.b16 %v172
    %v328 = vunpack.c.l.b16 %v173
    %v329 = vunpack.c.h.b16 %v173
    %v330 = vunpack.c.l.b16 %v174
    %v331 = vunpack.c.h.b16 %v174
    %v332 = vunpack.c.l.b16 %v175
    %v333 = vunpack.c.h.b16 %v175
    %v334 = vunpack.c.l.b16 %v176
    %v335 = vunpack.c.h.b16 %v176
    %v336 = vunpack.c.l.b16 %v177
    %v337 = vunpack.c.h.b16 %v177
    %v338 = vunpack.c.l.b16 %v178
    %v339 = vunpack.c.h.b16 %v178
    %v340 = vunpack.c.l.b16 %v179
    %v341 = vunpack.c.h.b16 %v179
    %v342 = vunpack.c.l.b16 %v180
    %v343 = vunpack.c.h.b16 %v180
    %v344 = vunpack.c.l.b16 %v181
    %v345 = vunpack.c.h.b16 %v181
    %v346 = vunpack.c.l.b16 %v182
    %v347 = vunpack.c.h.b16 %v182
    %v348 = vunpack.c.l.b16 %v183
    %v349 = vunpack.c.h.b16 %v183
    %v350 = vunpack.c.l.b16 %v184
    %v351 = vunpack.c.h.b16 %v184
    %v352 = vunpack.c.l.b16 %v185
    %v353 = vunpack.c.h.b16 %v185
    %v354 = vunpack.c.l.b16 %v186
    %v355 = vunpack.c.h.b16 %v186
    %v356 = vunpack.c.l.b16 %v187
    %v357 = vunpack.c.h.b16 %v187
    %v358 = vunpack.c.l.b16 %v188
    %v359 = vunpack.c.h.b16 %v188
    %v360 = vunpack.c.l.b16 %v189
    %v361 = vunpack.c.h.b16 %v189
    %v362 = vunpack.c.l.b16 %v190
    %v363 = vunpack.c.h.b16 %v190
    %v364 = vunpack.c.l.b16 %v191
    %v365 = vunpack.c.h.b16 %v191
    %v366 = vunpack.c.l.b16 %v192
    %v367 = vunpack.c.h.b16 %v192
    %v368 = vunpack.c.l.b16 %v193
    %v369 = vunpack.c.h.b16 %v193
    %v370 = vunpack.c.l.b16 %v194
    %v371 = vunpack.c.h.b16 %v194
    %v372 = vunpack.c.l.b16 %v195
    %v373 = vunpack.c.h.b16 %v195
    %v374 = vunpack.c.l.b16 %v196
    %v375 = vunpack.c.h.b16 %v196
    %v376 = vunpack.c.l.b16 %v197
    %v377 = vunpack.c.h.b16 %v197
    %v378 = vunpack.c.l.b16 %v198
    %v379 = vunpack.c.h.b16 %v198
    %v380 = vunpack.c.l.b16 %v199
    %v381 = vunpack.c.h.b16 %v199
    %v382 = vunpack.c.l.b16 %v200
    %v383 = vunpack.c.h.b16 %v200
    %v384 = vunpack.c.l.b16 %v201
    %v385 = vunpack.c.h.b16 %v201
    %v386 = vunpack.c.l.b16 %v202
    %v387 = vunpack.c.h.b16 %v202
    %v388 = vunpack.c.l.b16 %v203
    %v389 = vunpack.c.h.b16 %v203
    %v390 = vunpack.c.l.b16 %v204
    %v391 = vunpack.c.h.b16 %v204
    %v392 = vunpack.c.l.b16 %v205
    %v393 = vunpack.c.h.b16 %v205
    %v394 = vunpack.c.l.b16 %v206
    %v395 = vunpack.c.h.b16 %v206
    %v396 = vunpack.c.l.b16 %v207
    %v397 = vunpack.c.h.b16 %v207
    %v398 = vunpack.c.l.b16 %v208
    %v399 = vunpack.c.h.b16 %v208
    %v400 = vunpack.c.l.b16 %v209
    %v401 = vunpack.c.h.b16 %v209
    %v402 = vpack.c.b16 %v276, %v274
    %v403 = vpack.c.b16 %v277, %v275
    %v404 = vpack.c.b16 %v280, %v278
    %v405 = vpack.c.b16 %v281, %v279
    %v406 = vpack.c.b16 %v284, %v282
    %v407 = vpack.c.b16 %v285, %v283
    %v408 = vpack.c.b16 %v288, %v286
    %v409 = vpack.c.b16 %v289, %v287
    %v410 = vpack.c.b16 %v292, %v290
    %v411 = vpack.c.b16 %v293, %v291
    %v412 = vpack.c.b16 %v296, %v294
    %v413 = vpack.c.b16 %v297, %v295
    %v414 = vpack.c.b16 %v300, %v298
    %v415 = vpack.c.b16 %v301, %v299
    %v416 = vpack.c.b16 %v304, %v302
    %v417 = vpack.c.b16 %v305, %v303
    %v418 = vpack.c.b16 %v308, %v306
    %v419 = vpack.c.b16 %v309, %v307
    %v420 = vpack.c.b16 %v312, %v310
    %v421 = vpack.c.b16 %v313, %v311
    %v422 = vpack.c.b16 %v316, %v314
    %v423 = vpack.c.b16 %v317, %v315
    %v424 = vpack.c.b16 %v320, %v318
    %v425 = vpack.c.b16 %v321, %v319
    %v426 = vpack.c.b16 %v324, %v322
    %v427 = vpack.c.b16 %v325, %v323
    %v428 = vpack.c.b16 %v328, %v326
    %v429 = vpack.c.b16 %v329, %v327
    %v430 = vpack.c.b16 %v332, %v330
    %v431 = vpack.c.b16 %v333, %v331
    %v432 = vpack.c.b16 %v336, %v334
    %v433 = vpack.c.b16 %v337, %v335
    %v434 = vpack.c.b16 %v340, %v338
    %v435 = vpack.c.b16 %v341, %v339
    %v436 = vpack.c.b16 %v344, %v342
    %v437 = vpack.c.b16 %v345, %v343
    %v438 = vpack.c.b16 %v348, %v346
    %v439 = vpack.c.b16 %v349, %v347
    %v440 = vpack.c.b16 %v352, %v350
    %v441 = vpack.c.b16 %v353, %v351
    %v442 = vpack.c.b16 %v356, %v354
    %v443 = vpack.c.b16 %v357, %v355
    %v444 = vpack.c.b16 %v360, %v358
    %v445 = vpack.c.b16 %v361, %v359
    %v446 = vpack.c.b16 %v364, %v362
    %v447 = vpack.c.b16 %v365, %v363
    %v448 = vpack.c.b16 %v368, %v366
    %v449 = vpack.c.b16 %v369, %v367
    %v450 = vpack.c.b16 %v372, %v370
    %v451 = vpack.c.b16 %v373, %v371
    %v452 = vpack.c.b16 %v376, %v374
    %v453 = vpack.c.b16 %v377, %v375
    %v454 = vpack.c.b16 %v380, %v378
    %v455 = vpack.c.b16 %v381, %v379
    %v456 = vpack.c.b16 %v384, %v382
    %v457 = vpack.c.b16 %v385, %v383
    %v458 = vpack.c.b16 %v388, %v386
    %v459 = vpack.c.b16 %v389, %v387
    %v460 = vpack.c.b16 %v392, %v390
    %v461 = vpack.c.b16 %v393, %v391
    %v462 = vpack.c.b16 %v396, %v394
    %v463 = vpack.c.b16 %v397, %v395
    %v464 = vpack.c.b16 %v400, %v398
    %v465 = vpack.c.b16 %v401, %v399
    %530 = vmatprep.subr.bf16.mxu0 %v417
    %531 = vmatpush1.bf16.msra.mxu0 %v416
    %532 = vmatprep.subr.bf16.mxu0 %v415
    %533 = vmatpush1.bf16.msra.mxu0 %v414
    %534 = vmatprep.subr.bf16.mxu0 %v413
    %535 = vmatpush1.bf16.msra.mxu0 %v412
    %536 = vmatprep.subr.bf16.mxu0 %v411
    %537 = vmatpush1.bf16.msra.mxu0 %v410
    %538 = vmatprep.subr.bf16.mxu0 %v409
    %539 = vmatpush1.bf16.msra.mxu0 %v408
    %540 = vmatprep.subr.bf16.mxu0 %v407
    %541 = vmatpush1.bf16.msra.mxu0 %v406
    %542 = vmatprep.subr.bf16.mxu0 %v405
    %543 = vmatpush1.bf16.msra.mxu0 %v404
    %544 = vmatprep.subr.bf16.mxu0 %v403
    %545 = vmatpush1.bf16.msra.mxu0 %v402
    %546 = vmatprep.subr.bf16.mxu0 %v433
    %547 = vmatpush2.bf16.msra.mxu0 %v432
    %548 = vmatprep.subr.bf16.mxu0 %v431
    %549 = vmatpush2.bf16.msra.mxu0 %v430
    %550 = vmatprep.subr.bf16.mxu0 %v429
    %551 = vmatpush2.bf16.msra.mxu0 %v428
    %552 = vmatprep.subr.bf16.mxu0 %v427
    %553 = vmatpush2.bf16.msra.mxu0 %v426
    %554 = vmatprep.subr.bf16.mxu0 %v425
    %555 = vmatpush2.bf16.msra.mxu0 %v424
    %556 = vmatprep.subr.bf16.mxu0 %v423
    %557 = vmatpush2.bf16.msra.mxu0 %v422
    %558 = vmatprep.subr.bf16.mxu0 %v421
    %559 = vmatpush2.bf16.msra.mxu0 %v420
    %560 = vmatprep.subr.bf16.mxu0 %v419
    %561 = vmatpush2.bf16.msra.mxu0 %v418
    %562 = vmatprep.mubr.bf16.mxu0 %v129
    %563 = vmatmul.mubr.bf16.gmra.mxu0 %v128
    %v564 = vpop.f32.mrf.mxu0
    %v565 = vadd.f32 0.0, %v564
    %v566 = vpop.f32.mrf.mxu0
    %v567 = vadd.f32 0.0, %v566
    %v568 = vpop.f32.mrf.mxu0
    %v569 = vpop.f32.mrf.mxu0
    %570 = vdwg.mxu0
    %571 = vmatprep.subr.bf16.mxu0 %v449
    %572 = vmatpush1.bf16.msra.mxu0 %v448
    %573 = vmatprep.subr.bf16.mxu0 %v447
    %574 = vmatpush1.bf16.msra.mxu0 %v446
    %575 = vmatprep.subr.bf16.mxu0 %v445
    %576 = vmatpush1.bf16.msra.mxu0 %v444
    %577 = vmatprep.subr.bf16.mxu0 %v443
    %578 = vmatpush1.bf16.msra.mxu0 %v442
    %579 = vmatprep.subr.bf16.mxu0 %v441
    %580 = vmatpush1.bf16.msra.mxu0 %v440
    %581 = vmatprep.subr.bf16.mxu0 %v439
    %582 = vmatpush1.bf16.msra.mxu0 %v438
    %583 = vmatprep.subr.bf16.mxu0 %v437
    %584 = vmatpush1.bf16.msra.mxu0 %v436
    %585 = vmatprep.subr.bf16.mxu0 %v435
    %586 = vmatpush1.bf16.msra.mxu0 %v434
    %587 = vmatprep.subr.bf16.mxu0 %v465
    %588 = vmatpush2.bf16.msra.mxu0 %v464
    %589 = vmatprep.subr.bf16.mxu0 %v463
    %590 = vmatpush2.bf16.msra.mxu0 %v462
    %591 = vmatprep.subr.bf16.mxu0 %v461
    %592 = vmatpush2.bf16.msra.mxu0 %v460
    %593 = vmatprep.subr.bf16.mxu0 %v459
    %594 = vmatpush2.bf16.msra.mxu0 %v458
    %595 = vmatprep.subr.bf16.mxu0 %v457
    %596 = vmatpush2.bf16.msra.mxu0 %v456
    %597 = vmatprep.subr.bf16.mxu0 %v455
    %598 = vmatpush2.bf16.msra.mxu0 %v454
    %599 = vmatprep.subr.bf16.mxu0 %v453
    %600 = vmatpush2.bf16.msra.mxu0 %v452
    %601 = vmatprep.subr.bf16.mxu0 %v451
    %602 = vmatpush2.bf16.msra.mxu0 %v450
    %603 = vmatprep.mubr.bf16.mxu0 %v143
    %604 = vmatmul.mubr.bf16.gmra.mxu0 %v142
    %v605 = vpop.f32.mrf.mxu0
    %v606 = vadd.f32 %v565, %v605
    %v607 = vpop.f32.mrf.mxu0
    %v608 = vadd.f32 %v567, %v607
    %v609 = vpop.f32.mrf.mxu0
    %v610 = vpop.f32.mrf.mxu0
    %611 = vdwg.mxu0
    %v612 = vxor.u32 %v606, 2147483648
    %v613 = vxor.u32 %v608, 2147483648
    %v614 = vmul.f32 %v612, 1.442695
    %v615 = vpow.pop %v614
    %v616 = vmul.f32 %v613, 1.442695
    %v617 = vpow.pop %v616
    %v618 = vadd.f32 %v615, 1.0
    %v619 = vadd.f32 %v617, 1.0
    %v620 = vrcp.pop %v618
    %v621 = vmul.f32 1.0, %v620
    %v622 = vrcp.pop %v619
    %v623 = vmul.f32 1.0, %v622
    %v626 = vcombine.low %v621, %v623
    %v628 = vunpack.c.l.s4 1966171168
    %v629 = vunpack.c.0.s8 %v628
    %v630 = vlaneseq
    %v631 = vshrl.u32 %v630, 7
    %v632 = vsub.s32 %v629, %v631
    %v633 = vrot.slane %v626, %v632
    %v634 = vcombine.high %v633, %v633
    %v636 = vunpack.c.l.s4 1966171168
    %v637 = vunpack.c.0.s8 %v636
    %v638 = vlaneseq
    %v639 = vshrl.u32 %v638, 7
    %v640 = vsub.s32 %v637, %v639
    %v641 = vrot.slane %v633, %v640
    %v643 = vunpack.c.l.s4 1966171168
    %v644 = vunpack.c.0.s8 %v643
    %v645 = vlaneseq
    %v646 = vshrl.u32 %v645, 7
    %v647 = vsub.s32 %v644, %v646
    %v648 = vrot.slane %v634, %v647
    %v649 = vlaneseq
    %v650 = vshrl.u32 %v649, 7
    %v651 = vsub.s32 0, %v650
    %v652 = vrot.slane %v641, %v651
    %v653 = vlaneseq
    %v654 = vshrl.u32 %v653, 7
    %v655 = vsub.s32 1, %v654
    %v656 = vrot.slane %v641, %v655
    %v657 = vlaneseq
    %v658 = vshrl.u32 %v657, 7
    %v659 = vsub.s32 0, %v658
    %v660 = vrot.slane %v648, %v659
    %v661 = vlaneseq
    %v662 = vshrl.u32 %v661, 7
    %v663 = vsub.s32 1, %v662
    %v664 = vrot.slane %v648, %v663
    %v669 = vmul.f32 %v652, %v40
    %v670 = vmul.f32 %v656, %v44
    %v671 = vmul.f32 %v660, %v41
    %v672 = vmul.f32 %v664, %v45
    %v677 = vcombine.low %v669, %v670
    %v678 = vcombine.low %v671, %v672
    %681 = vst [vmem:[#allocation7] sm:$0xff] %v677
    %682 = vst [vmem:[#allocation7 + $0x8] sm:$0xff] %v678
    // Predicated region
    $region18: #{tpu_custom_call.1} parent=1 // pred_check
      _
    $region19: #{tpu_custom_call.1} parent=1 // pred_check_branch
      %684 = sbr.rel (0) target = $region21
    $region20: #{tpu_custom_call.1} parent=1 // pred_region
      %s686 = ssub.s32 256, 256
      %687 = vsyncadd [#allocation4], %s686
      %s688 = sshll.u32 [#allocation7], 4
      %s689 = int_to_ptr.vmem [resolvable:$true] %s688
      %694 = dma.vmem_to_hbm [thread:$0]  %s689, 256, %s2, [#allocation4], 128, 128, 8
    $region21: #{tpu_custom_call.1} parent=1 // pred_fallthru
      _
    // Predicated region
    $region22: #{tpu_custom_call.1} parent=1 // pred_check
      _
    $region23: #{tpu_custom_call.1} parent=1 // pred_check_branch
      %696 = sbr.rel (0) target = $region25
    $region24: #{tpu_custom_call.1} parent=1 // pred_region
      %697 = dma.done [#allocation4], 256
    $region25: #{tpu_custom_call.1} parent=1 // pred_fallthru
      _
    %698 = vsyncpa [#allocation3], 1
    %699 = vsyncpa [#allocation6], 1
    %700 = vsyncpa [#allocation4], 1

// kernel: tpu_custom_call.1
$region0: #{tpu_custom_call.1}
  #allocation0 [shape = 'u32[]', space=smem, size = 0x4, offset = 0x4, fixed_abs, tag = 'smem constant byte address 0x4 - core index']
  #allocation1 [shape = 'u32[144,128]{1,0:T(1,128)}', space=vmem, size = 0x12000, scoped, tag = 'internal scratch']
  %s0 = inlined_call_operand.hbm [shape: bf16[512,256], index: 0, kind: input, shape index: {}]
  %s1 = inlined_call_operand.hbm [shape: f32[2,4,256], index: 1, kind: input, shape index: {}]
  %s2 = inlined_call_operand.hbm [shape: f32[2,4,256], index: 2, kind: output, shape index: {}]
  %s3 = sld [smem:[#allocation0]]
  $region26: #{tpu_custom_call.1} parent=0
    _
  %s5 = ssub.s32 1, %s3
  %s6 = scalar_select 0, %s5, %s3
  $region1: #{tpu_custom_call.1} parent=0
    #allocation2 [shape = 'u8[262144]{0}', space=vmem, size = 0x40000, scoped, tag = 'input window, operand 0, single buffered']
    #allocation3 [shape = 's32[1]{0}', space=sflag, size = 0x4, scoped, tag = 'scoped memory for tpu_custom_call.1']
    #allocation4 [shape = 's32[1]{0}', space=sflag, size = 0x4, scoped, tag = 'scoped memory for tpu_custom_call.1']
    #allocation5 [shape = 'u8[8192]{0}', space=vmem, size = 0x2000, scoped, tag = 'input window, operand 1, single buffered']
    #allocation6 [shape = 's32[1]{0}', space=sflag, size = 0x4, scoped, tag = 'scoped memory for tpu_custom_call.1']
    #allocation7 [shape = 'u8[8192]{0}', space=vmem, size = 0x2000, scoped, tag = 'output window, operand 0, single buffered']
    %7 = vsyncpa [#allocation3], 0
    %8 = vsyncpa [#allocation6], 0
    %9 = vsyncpa [#allocation4], 0
    // Predicated region
    $region2: #{tpu_custom_call.1} parent=1 // pred_check
      _
    $region3: #{tpu_custom_call.1} parent=1 // pred_check_branch
      %11 = sbr.rel (0) target = $region5
    $region4: #{tpu_custom_call.1} parent=1 // pred_region
      %s13 = ssub.s32 8192, 8192
      %14 = vsyncadd [#allocation3], %s13
      %s15 = sshll.u32 [#allocation2], 4
      %s16 = int_to_ptr.vmem [resolvable:$true] %s15
      %21 = dma.hbm_to_vmem [thread:$0]  %s0, 8192, %s16, [#allocation3], 128, 128, 8
    $region5: #{tpu_custom_call.1} parent=1 // pred_fallthru
      _
    // Predicated region
    $region6: #{tpu_custom_call.1} parent=1 // pred_check
      _
    $region7: #{tpu_custom_call.1} parent=1 // pred_check_branch
      %23 = sbr.rel (0) target = $region9
    $region8: #{tpu_custom_call.1} parent=1 // pred_region
      %s25 = ssub.s32 256, 256
      %26 = vsyncadd [#allocation6], %s25
      %s27 = sshll.u32 [#allocation5], 4
      %s28 = int_to_ptr.vmem [resolvable:$true] %s27
      %33 = dma.hbm_to_vmem [thread:$0]  %s1, 256, %s28, [#allocation6], 128, 128, 8
    $region9: #{tpu_custom_call.1} parent=1 // pred_fallthru
      _
    // Predicated region
    $region10: #{tpu_custom_call.1} parent=1 // pred_check
      _
    $region11: #{tpu_custom_call.1} parent=1 // pred_check_branch
      %35 = sbr.rel (0) target = $region13
    $region12: #{tpu_custom_call.1} parent=1 // pred_region
      %36 = dma.done [#allocation3], 8192
    $region13: #{tpu_custom_call.1} parent=1 // pred_fallthru
      _
    // Predicated region
    $region14: #{tpu_custom_call.1} parent=1 // pred_check
      _
    $region15: #{tpu_custom_call.1} parent=1 // pred_check_branch
      %38 = sbr.rel (0) target = $region17
    $region16: #{tpu_custom_call.1} parent=1 // pred_region
      %39 = dma.done [#allocation6], 256
    $region17: #{tpu_custom_call.1} parent=1 // pred_fallthru
      _
    %v40 = vld [vmem:[#allocation5] sm:$0xff]
    %v41 = vld [vmem:[#allocation5 + $0x8] sm:$0xff]
    %v44 = vcombine.high %v40, %v40
    %v45 = vcombine.high %v41, %v41
    %vm48 = vcmask 1043456
    %v49 = vsel %vm48, %v40, 0.0
    %v50 = vrot.slane %v49, 4
    %v51 = vadd.f32 %v49, %v50
    %v52 = vrot.slane %v51, 2
    %v53 = vadd.f32 %v51, %v52
    %v54 = vrot.slane %v53, 1
    %v55 = vadd.f32 %v53, %v54
    %v56 = vsel %vm48, %v44, 0.0
    %v57 = vrot.slane %v56, 4
    %v58 = vadd.f32 %v56, %v57
    %v59 = vrot.slane %v58, 2
    %v60 = vadd.f32 %v58, %v59
    %v61 = vrot.slane %v60, 1
    %v62 = vadd.f32 %v60, %v61
    %v63 = vsel %vm48, %v41, 0.0
    %v64 = vrot.slane %v63, 4
    %v65 = vadd.f32 %v63, %v64
    %v66 = vrot.slane %v65, 2
    %v67 = vadd.f32 %v65, %v66
    %v68 = vrot.slane %v67, 1
    %v69 = vadd.f32 %v67, %v68
    %v70 = vsel %vm48, %v45, 0.0
    %v71 = vrot.slane %v70, 4
    %v72 = vadd.f32 %v70, %v71
    %v73 = vrot.slane %v72, 2
    %v74 = vadd.f32 %v72, %v73
    %v75 = vrot.slane %v74, 1
    %v76 = vadd.f32 %v74, %v75
    %v77 = vmul.f32 %v55, 0.25
    %v78 = vmul.f32 %v62, 0.25
    %v79 = vmul.f32 %v69, 0.25
    %v80 = vmul.f32 %v76, 0.25
    %v81 = vsel %vm48, %v40, -inf
    %v82 = vrot.slane %v81, 4
    %v83 = vmax.f32 %v81, %v82
    %v84 = vrot.slane %v83, 2
    %v85 = vmax.f32 %v83, %v84
    %v86 = vrot.slane %v85, 1
    %v87 = vmax.f32 %v85, %v86
    %v88 = vsel %vm48, %v44, -inf
    %v89 = vrot.slane %v88, 4
    %v90 = vmax.f32 %v88, %v89
    %v91 = vrot.slane %v90, 2
    %v92 = vmax.f32 %v90, %v91
    %v93 = vrot.slane %v92, 1
    %v94 = vmax.f32 %v92, %v93
    %v95 = vsel %vm48, %v41, -inf
    %v96 = vrot.slane %v95, 4
    %v97 = vmax.f32 %v95, %v96
    %v98 = vrot.slane %v97, 2
    %v99 = vmax.f32 %v97, %v98
    %v100 = vrot.slane %v99, 1
    %v101 = vmax.f32 %v99, %v100
    %v102 = vsel %vm48, %v45, -inf
    %v103 = vrot.slane %v102, 4
    %v104 = vmax.f32 %v102, %v103
    %v105 = vrot.slane %v104, 2
    %v106 = vmax.f32 %v104, %v105
    %v107 = vrot.slane %v106, 1
    %v108 = vmax.f32 %v106, %v107
    %v109 = vpack.c.bf16 %v77, %v77
    %v110 = vpack.c.bf16 %v78, %v78
    %v111 = vpack.c.bf16 %v79, %v79
    %v112 = vpack.c.bf16 %v80, %v80
    %v113 = vpack.c.bf16 %v87, %v87
    %v114 = vpack.c.bf16 %v94, %v94
    %v115 = vpack.c.bf16 %v101, %v101
    %v116 = vpack.c.bf16 %v108, %v108
    %v121 = vunpack.c.l.b16 %v109
    %v122 = vunpack.c.l.b16 %v110
    %v123 = vunpack.c.l.b16 %v111
    %v124 = vunpack.c.l.b16 %v112
    %vm125 = vcmask 1041409
    %v126 = vsel %vm125, %v123, %v121
    %v127 = vsel %vm125, %v124, %v122
    %v128 = vpack.c.b16 %v126, %v126
    %v129 = vpack.c.b16 %v127, %v127
    %v136 = vunpack.c.l.b16 %v113
    %v137 = vunpack.c.l.b16 %v114
    %v138 = vunpack.c.l.b16 %v115
    %v139 = vunpack.c.l.b16 %v116
    %v140 = vsel %vm125, %v138, %v136
    %v141 = vsel %vm125, %v139, %v137
    %v142 = vpack.c.b16 %v140, %v140
    %v143 = vpack.c.b16 %v141, %v141
    %v146 = vld [vmem:[#allocation2] sm:$0xff]
    %v147 = vld [vmem:[#allocation2 + $0x8] sm:$0xff]
    %v148 = vld [vmem:[#allocation2 + $0x10] sm:$0xff]
    %v149 = vld [vmem:[#allocation2 + $0x18] sm:$0xff]
    %v150 = vld [vmem:[#allocation2 + $0x20] sm:$0xff]
    %v151 = vld [vmem:[#allocation2 + $0x28] sm:$0xff]
    %v152 = vld [vmem:[#allocation2 + $0x30] sm:$0xff]
    %v153 = vld [vmem:[#allocation2 + $0x38] sm:$0xff]
    %v154 = vld [vmem:[#allocation2 + $0x40] sm:$0xff]
    %v155 = vld [vmem:[#allocation2 + $0x48] sm:$0xff]
    %v156 = vld [vmem:[#allocation2 + $0x50] sm:$0xff]
    %v157 = vld [vmem:[#allocation2 + $0x58] sm:$0xff]
    %v158 = vld [vmem:[#allocation2 + $0x60] sm:$0xff]
    %v159 = vld [vmem:[#allocation2 + $0x68] sm:$0xff]
    %v160 = vld [vmem:[#allocation2 + $0x70] sm:$0xff]
    %v161 = vld [vmem:[#allocation2 + $0x78] sm:$0xff]
    %v162 = vld [vmem:[#allocation2 + $0x80] sm:$0xff]
    %v163 = vld [vmem:[#allocation2 + $0x88] sm:$0xff]
    %v164 = vld [vmem:[#allocation2 + $0x90] sm:$0xff]
    %v165 = vld [vmem:[#allocation2 + $0x98] sm:$0xff]
    %v166 = vld [vmem:[#allocation2 + $0xa0] sm:$0xff]
    %v167 = vld [vmem:[#allocation2 + $0xa8] sm:$0xff]
    %v168 = vld [vmem:[#allocation2 + $0xb0] sm:$0xff]
    %v169 = vld [vmem:[#allocation2 + $0xb8] sm:$0xff]
    %v170 = vld [vmem:[#allocation2 + $0xc0] sm:$0xff]
    %v171 = vld [vmem:[#allocation2 + $0xc8] sm:$0xff]
    %v172 = vld [vmem:[#allocation2 + $0xd0] sm:$0xff]
    %v173 = vld [vmem:[#allocation2 + $0xd8] sm:$0xff]
    %v174 = vld [vmem:[#allocation2 + $0xe0] sm:$0xff]
    %v175 = vld [vmem:[#allocation2 + $0xe8] sm:$0xff]
    %v176 = vld [vmem:[#allocation2 + $0xf0] sm:$0xff]
    %v177 = vld [vmem:[#allocation2 + $0xf8] sm:$0xff]
    %v178 = vld [vmem:[#allocation2 + $0x100] sm:$0xff]
    %v179 = vld [vmem:[#allocation2 + $0x108] sm:$0xff]
    %v180 = vld [vmem:[#allocation2 + $0x110] sm:$0xff]
    %v181 = vld [vmem:[#allocation2 + $0x118] sm:$0xff]
    %v182 = vld [vmem:[#allocation2 + $0x120] sm:$0xff]
    %v183 = vld [vmem:[#allocation2 + $0x128] sm:$0xff]
    %v184 = vld [vmem:[#allocation2 + $0x130] sm:$0xff]
    %v185 = vld [vmem:[#allocation2 + $0x138] sm:$0xff]
    %v186 = vld [vmem:[#allocation2 + $0x140] sm:$0xff]
    %v187 = vld [vmem:[#allocation2 + $0x148] sm:$0xff]
    %v188 = vld [vmem:[#allocation2 + $0x150] sm:$0xff]
    %v189 = vld [vmem:[#allocation2 + $0x158] sm:$0xff]
    %v190 = vld [vmem:[#allocation2 + $0x160] sm:$0xff]
    %v191 = vld [vmem:[#allocation2 + $0x168] sm:$0xff]
    %v192 = vld [vmem:[#allocation2 + $0x170] sm:$0xff]
    %v193 = vld [vmem:[#allocation2 + $0x178] sm:$0xff]
    %v194 = vld [vmem:[#allocation2 + $0x180] sm:$0xff]
    %v195 = vld [vmem:[#allocation2 + $0x188] sm:$0xff]
    %v196 = vld [vmem:[#allocation2 + $0x190] sm:$0xff]
    %v197 = vld [vmem:[#allocation2 + $0x198] sm:$0xff]
    %v198 = vld [vmem:[#allocation2 + $0x1a0] sm:$0xff]
    %v199 = vld [vmem:[#allocation2 + $0x1a8] sm:$0xff]
    %v200 = vld [vmem:[#allocation2 + $0x1b0] sm:$0xff]
    %v201 = vld [vmem:[#allocation2 + $0x1b8] sm:$0xff]
    %v202 = vld [vmem:[#allocation2 + $0x1c0] sm:$0xff]
    %v203 = vld [vmem:[#allocation2 + $0x1c8] sm:$0xff]
    %v204 = vld [vmem:[#allocation2 + $0x1d0] sm:$0xff]
    %v205 = vld [vmem:[#allocation2 + $0x1d8] sm:$0xff]
    %v206 = vld [vmem:[#allocation2 + $0x1e0] sm:$0xff]
    %v207 = vld [vmem:[#allocation2 + $0x1e8] sm:$0xff]
    %v208 = vld [vmem:[#allocation2 + $0x1f0] sm:$0xff]
    %v209 = vld [vmem:[#allocation2 + $0x1f8] sm:$0xff]
    %v274 = vunpack.c.l.b16 %v146
    %v275 = vunpack.c.h.b16 %v146
    %v276 = vunpack.c.l.b16 %v147
    %v277 = vunpack.c.h.b16 %v147
    %v278 = vunpack.c.l.b16 %v148
    %v279 = vunpack.c.h.b16 %v148
    %v280 = vunpack.c.l.b16 %v149
    %v281 = vunpack.c.h.b16 %v149
    %v282 = vunpack.c.l.b16 %v150
    %v283 = vunpack.c.h.b16 %v150
    %v284 = vunpack.c.l.b16 %v151
    %v285 = vunpack.c.h.b16 %v151
    %v286 = vunpack.c.l.b16 %v152
    %v287 = vunpack.c.h.b16 %v152
    %v288 = vunpack.c.l.b16 %v153
    %v289 = vunpack.c.h.b16 %v153
    %v290 = vunpack.c.l.b16 %v154
    %v291 = vunpack.c.h.b16 %v154
    %v292 = vunpack.c.l.b16 %v155
    %v293 = vunpack.c.h.b16 %v155
    %v294 = vunpack.c.l.b16 %v156
    %v295 = vunpack.c.h.b16 %v156
    %v296 = vunpack.c.l.b16 %v157
    %v297 = vunpack.c.h.b16 %v157
    %v298 = vunpack.c.l.b16 %v158
    %v299 = vunpack.c.h.b16 %v158
    %v300 = vunpack.c.l.b16 %v159
    %v301 = vunpack.c.h.b16 %v159
    %v302 = vunpack.c.l.b16 %v160
    %v303 = vunpack.c.h.b16 %v160
    %v304 = vunpack.c.l.b16 %v161
    %v305 = vunpack.c.h.b16 %v161
    %v306 = vunpack.c.l.b16 %v162
    %v307 = vunpack.c.h.b16 %v162
    %v308 = vunpack.c.l.b16 %v163
    %v309 = vunpack.c.h.b16 %v163
    %v310 = vunpack.c.l.b16 %v164
    %v311 = vunpack.c.h.b16 %v164
    %v312 = vunpack.c.l.b16 %v165
    %v313 = vunpack.c.h.b16 %v165
    %v314 = vunpack.c.l.b16 %v166
    %v315 = vunpack.c.h.b16 %v166
    %v316 = vunpack.c.l.b16 %v167
    %v317 = vunpack.c.h.b16 %v167
    %v318 = vunpack.c.l.b16 %v168
    %v319 = vunpack.c.h.b16 %v168
    %v320 = vunpack.c.l.b16 %v169
    %v321 = vunpack.c.h.b16 %v169
    %v322 = vunpack.c.l.b16 %v170
    %v323 = vunpack.c.h.b16 %v170
    %v324 = vunpack.c.l.b16 %v171
    %v325 = vunpack.c.h.b16 %v171
    %v326 = vunpack.c.l.b16 %v172
    %v327 = vunpack.c.h.b16 %v172
    %v328 = vunpack.c.l.b16 %v173
    %v329 = vunpack.c.h.b16 %v173
    %v330 = vunpack.c.l.b16 %v174
    %v331 = vunpack.c.h.b16 %v174
    %v332 = vunpack.c.l.b16 %v175
    %v333 = vunpack.c.h.b16 %v175
    %v334 = vunpack.c.l.b16 %v176
    %v335 = vunpack.c.h.b16 %v176
    %v336 = vunpack.c.l.b16 %v177
    %v337 = vunpack.c.h.b16 %v177
    %v338 = vunpack.c.l.b16 %v178
    %v339 = vunpack.c.h.b16 %v178
    %v340 = vunpack.c.l.b16 %v179
    %v341 = vunpack.c.h.b16 %v179
    %v342 = vunpack.c.l.b16 %v180
    %v343 = vunpack.c.h.b16 %v180
    %v344 = vunpack.c.l.b16 %v181
    %v345 = vunpack.c.h.b16 %v181
    %v346 = vunpack.c.l.b16 %v182
    %v347 = vunpack.c.h.b16 %v182
    %v348 = vunpack.c.l.b16 %v183
    %v349 = vunpack.c.h.b16 %v183
    %v350 = vunpack.c.l.b16 %v184
    %v351 = vunpack.c.h.b16 %v184
    %v352 = vunpack.c.l.b16 %v185
    %v353 = vunpack.c.h.b16 %v185
    %v354 = vunpack.c.l.b16 %v186
    %v355 = vunpack.c.h.b16 %v186
    %v356 = vunpack.c.l.b16 %v187
    %v357 = vunpack.c.h.b16 %v187
    %v358 = vunpack.c.l.b16 %v188
    %v359 = vunpack.c.h.b16 %v188
    %v360 = vunpack.c.l.b16 %v189
    %v361 = vunpack.c.h.b16 %v189
    %v362 = vunpack.c.l.b16 %v190
    %v363 = vunpack.c.h.b16 %v190
    %v364 = vunpack.c.l.b16 %v191
    %v365 = vunpack.c.h.b16 %v191
    %v366 = vunpack.c.l.b16 %v192
    %v367 = vunpack.c.h.b16 %v192
    %v368 = vunpack.c.l.b16 %v193
    %v369 = vunpack.c.h.b16 %v193
    %v370 = vunpack.c.l.b16 %v194
    %v371 = vunpack.c.h.b16 %v194
    %v372 = vunpack.c.l.b16 %v195
    %v373 = vunpack.c.h.b16 %v195
    %v374 = vunpack.c.l.b16 %v196
    %v375 = vunpack.c.h.b16 %v196
    %v376 = vunpack.c.l.b16 %v197
    %v377 = vunpack.c.h.b16 %v197
    %v378 = vunpack.c.l.b16 %v198
    %v379 = vunpack.c.h.b16 %v198
    %v380 = vunpack.c.l.b16 %v199
    %v381 = vunpack.c.h.b16 %v199
    %v382 = vunpack.c.l.b16 %v200
    %v383 = vunpack.c.h.b16 %v200
    %v384 = vunpack.c.l.b16 %v201
    %v385 = vunpack.c.h.b16 %v201
    %v386 = vunpack.c.l.b16 %v202
    %v387 = vunpack.c.h.b16 %v202
    %v388 = vunpack.c.l.b16 %v203
    %v389 = vunpack.c.h.b16 %v203
    %v390 = vunpack.c.l.b16 %v204
    %v391 = vunpack.c.h.b16 %v204
    %v392 = vunpack.c.l.b16 %v205
    %v393 = vunpack.c.h.b16 %v205
    %v394 = vunpack.c.l.b16 %v206
    %v395 = vunpack.c.h.b16 %v206
    %v396 = vunpack.c.l.b16 %v207
    %v397 = vunpack.c.h.b16 %v207
    %v398 = vunpack.c.l.b16 %v208
    %v399 = vunpack.c.h.b16 %v208
    %v400 = vunpack.c.l.b16 %v209
    %v401 = vunpack.c.h.b16 %v209
    %v402 = vpack.c.b16 %v276, %v274
    %v403 = vpack.c.b16 %v277, %v275
    %v404 = vpack.c.b16 %v280, %v278
    %v405 = vpack.c.b16 %v281, %v279
    %v406 = vpack.c.b16 %v284, %v282
    %v407 = vpack.c.b16 %v285, %v283
    %v408 = vpack.c.b16 %v288, %v286
    %v409 = vpack.c.b16 %v289, %v287
    %v410 = vpack.c.b16 %v292, %v290
    %v411 = vpack.c.b16 %v293, %v291
    %v412 = vpack.c.b16 %v296, %v294
    %v413 = vpack.c.b16 %v297, %v295
    %v414 = vpack.c.b16 %v300, %v298
    %v415 = vpack.c.b16 %v301, %v299
    %v416 = vpack.c.b16 %v304, %v302
    %v417 = vpack.c.b16 %v305, %v303
    %v418 = vpack.c.b16 %v308, %v306
    %v419 = vpack.c.b16 %v309, %v307
    %v420 = vpack.c.b16 %v312, %v310
    %v421 = vpack.c.b16 %v313, %v311
    %v422 = vpack.c.b16 %v316, %v314
    %v423 = vpack.c.b16 %v317, %v315
    %v424 = vpack.c.b16 %v320, %v318
    %v425 = vpack.c.b16 %v321, %v319
    %v426 = vpack.c.b16 %v324, %v322
    %v427 = vpack.c.b16 %v325, %v323
    %v428 = vpack.c.b16 %v328, %v326
    %v429 = vpack.c.b16 %v329, %v327
    %v430 = vpack.c.b16 %v332, %v330
    %v431 = vpack.c.b16 %v333, %v331
    %v432 = vpack.c.b16 %v336, %v334
    %v433 = vpack.c.b16 %v337, %v335
    %v434 = vpack.c.b16 %v340, %v338
    %v435 = vpack.c.b16 %v341, %v339
    %v436 = vpack.c.b16 %v344, %v342
    %v437 = vpack.c.b16 %v345, %v343
    %v438 = vpack.c.b16 %v348, %v346
    %v439 = vpack.c.b16 %v349, %v347
    %v440 = vpack.c.b16 %v352, %v350
    %v441 = vpack.c.b16 %v353, %v351
    %v442 = vpack.c.b16 %v356, %v354
    %v443 = vpack.c.b16 %v357, %v355
    %v444 = vpack.c.b16 %v360, %v358
    %v445 = vpack.c.b16 %v361, %v359
    %v446 = vpack.c.b16 %v364, %v362
    %v447 = vpack.c.b16 %v365, %v363
    %v448 = vpack.c.b16 %v368, %v366
    %v449 = vpack.c.b16 %v369, %v367
    %v450 = vpack.c.b16 %v372, %v370
    %v451 = vpack.c.b16 %v373, %v371
    %v452 = vpack.c.b16 %v376, %v374
    %v453 = vpack.c.b16 %v377, %v375
    %v454 = vpack.c.b16 %v380, %v378
    %v455 = vpack.c.b16 %v381, %v379
    %v456 = vpack.c.b16 %v384, %v382
    %v457 = vpack.c.b16 %v385, %v383
    %v458 = vpack.c.b16 %v388, %v386
    %v459 = vpack.c.b16 %v389, %v387
    %v460 = vpack.c.b16 %v392, %v390
    %v461 = vpack.c.b16 %v393, %v391
    %v462 = vpack.c.b16 %v396, %v394
    %v463 = vpack.c.b16 %v397, %v395
    %v464 = vpack.c.b16 %v400, %v398
    %v465 = vpack.c.b16 %v401, %v399
    %530 = vmatprep.subr.bf16.mxu0 %v417
    %531 = vmatpush1.bf16.msra.mxu0 %v416
    %532 = vmatprep.subr.bf16.mxu0 %v415
    %533 = vmatpush1.bf16.msra.mxu0 %v414
    %534 = vmatprep.subr.bf16.mxu0 %v413
    %535 = vmatpush1.bf16.msra.mxu0 %v412
    %536 = vmatprep.subr.bf16.mxu0 %v411
    %537 = vmatpush1.bf16.msra.mxu0 %v410
    %538 = vmatprep.subr.bf16.mxu0 %v409
    %539 = vmatpush1.bf16.msra.mxu0 %v408
    %540 = vmatprep.subr.bf16.mxu0 %v407
    %541 = vmatpush1.bf16.msra.mxu0 %v406
    %542 = vmatprep.subr.bf16.mxu0 %v405
    %543 = vmatpush1.bf16.msra.mxu0 %v404
    %544 = vmatprep.subr.bf16.mxu0 %v403
    %545 = vmatpush1.bf16.msra.mxu0 %v402
    %546 = vmatprep.subr.bf16.mxu0 %v433
    %547 = vmatpush2.bf16.msra.mxu0 %v432
    %548 = vmatprep.subr.bf16.mxu0 %v431
    %549 = vmatpush2.bf16.msra.mxu0 %v430
    %550 = vmatprep.subr.bf16.mxu0 %v429
    %551 = vmatpush2.bf16.msra.mxu0 %v428
    %552 = vmatprep.subr.bf16.mxu0 %v427
    %553 = vmatpush2.bf16.msra.mxu0 %v426
    %554 = vmatprep.subr.bf16.mxu0 %v425
    %555 = vmatpush2.bf16.msra.mxu0 %v424
    %556 = vmatprep.subr.bf16.mxu0 %v423
    %557 = vmatpush2.bf16.msra.mxu0 %v422
    %558 = vmatprep.subr.bf16.mxu0 %v421
    %559 = vmatpush2.bf16.msra.mxu0 %v420
    %560 = vmatprep.subr.bf16.mxu0 %v419
    %561 = vmatpush2.bf16.msra.mxu0 %v418
    %562 = vmatprep.mubr.bf16.mxu0 %v129
    %563 = vmatmul.mubr.bf16.gmra.mxu0 %v128
    %v564 = vpop.f32.mrf.mxu0
    %v565 = vadd.f32 0.0, %v564
    %v566 = vpop.f32.mrf.mxu0
    %v567 = vadd.f32 0.0, %v566
    %v568 = vpop.f32.mrf.mxu0
    %v569 = vpop.f32.mrf.mxu0
    %570 = vdwg.mxu0
    %571 = vmatprep.subr.bf16.mxu0 %v449
    %572 = vmatpush1.bf16.msra.mxu0 %v448
    %573 = vmatprep.subr.bf16.mxu0 %v447
    %574 = vmatpush1.bf16.msra.mxu0 %v446
    %575 = vmatprep.subr.bf16.mxu0 %v445
    %576 = vmatpush1.bf16.msra.mxu0 %v444
    %577 = vmatprep.subr.bf16.mxu0 %v443
    %578 = vmatpush1.bf16.msra.mxu0 %v442
    %579 = vmatprep.subr.bf16.mxu0 %v441
    %580 = vmatpush1.bf16.msra.mxu0 %v440
    %581 = vmatprep.subr.bf16.mxu0 %v439
    %582 = vmatpush1.bf16.msra.mxu0 %v438
    %583 = vmatprep.subr.bf16.mxu0 %v437
    %584 = vmatpush1.bf16.msra.mxu0 %v436
    %585 = vmatprep.subr.bf16.mxu0 %v435
    %586 = vmatpush1.bf16.msra.mxu0 %v434
    %587 = vmatprep.subr.bf16.mxu0 %v465
    %588 = vmatpush2.bf16.msra.mxu0 %v464
    %589 = vmatprep.subr.bf16.mxu0 %v463
    %590 = vmatpush2.bf16.msra.mxu0 %v462
    %591 = vmatprep.subr.bf16.mxu0 %v461
    %592 = vmatpush2.bf16.msra.mxu0 %v460
    %593 = vmatprep.subr.bf16.mxu0 %v459
    %594 = vmatpush2.bf16.msra.mxu0 %v458
    %595 = vmatprep.subr.bf16.mxu0 %v457
    %596 = vmatpush2.bf16.msra.mxu0 %v456
    %597 = vmatprep.subr.bf16.mxu0 %v455
    %598 = vmatpush2.bf16.msra.mxu0 %v454
    %599 = vmatprep.subr.bf16.mxu0 %v453
    %600 = vmatpush2.bf16.msra.mxu0 %v452
    %601 = vmatprep.subr.bf16.mxu0 %v451
    %602 = vmatpush2.bf16.msra.mxu0 %v450
    %603 = vmatprep.mubr.bf16.mxu0 %v143
    %604 = vmatmul.mubr.bf16.gmra.mxu0 %v142
    %v605 = vpop.f32.mrf.mxu0
    %v606 = vadd.f32 %v565, %v605
    %v607 = vpop.f32.mrf.mxu0
    %v608 = vadd.f32 %v567, %v607
    %v609 = vpop.f32.mrf.mxu0
    %v610 = vpop.f32.mrf.mxu0
    %611 = vdwg.mxu0
    %v612 = vxor.u32 %v606, 2147483648
    %v613 = vxor.u32 %v608, 2147483648
    %v614 = vmul.f32 %v612, 1.442695
    %v615 = vpow.pop %v614
    %v616 = vmul.f32 %v613, 1.442695
    %v617 = vpow.pop %v616
    %v618 = vadd.f32 %v615, 1.0
    %v619 = vadd.f32 %v617, 1.0
    %v620 = vrcp.pop %v618
    %v621 = vmul.f32 1.0, %v620
    %v622 = vrcp.pop %v619
    %v623 = vmul.f32 1.0, %v622
    %v626 = vcombine.low %v621, %v623
    %v628 = vunpack.c.l.s4 1966171168
    %v629 = vunpack.c.0.s8 %v628
    %v630 = vlaneseq
    %v631 = vshrl.u32 %v630, 7
    %v632 = vsub.s32 %v629, %v631
    %v633 = vrot.slane %v626, %v632
    %v634 = vcombine.high %v633, %v633
    %v636 = vunpack.c.l.s4 1966171168
    %v637 = vunpack.c.0.s8 %v636
    %v638 = vlaneseq
    %v639 = vshrl.u32 %v638, 7
    %v640 = vsub.s32 %v637, %v639
    %v641 = vrot.slane %v633, %v640
    %v643 = vunpack.c.l.s4 1966171168
    %v644 = vunpack.c.0.s8 %v643
    %v645 = vlaneseq
    %v646 = vshrl.u32 %v645, 7
    %v647 = vsub.s32 %v644, %v646
    %v648 = vrot.slane %v634, %v647
    %v649 = vlaneseq
    %v650 = vshrl.u32 %v649, 7
    %v651 = vsub.s32 0, %v650
    %v652 = vrot.slane %v641, %v651
    %v653 = vlaneseq
    %v654 = vshrl.u32 %v653, 7
    %v655 = vsub.s32 1, %v654
    %v656 = vrot.slane %v641, %v655
    %v657 = vlaneseq
    %v658 = vshrl.u32 %v657, 7
    %v659 = vsub.s32 0, %v658
    %v660 = vrot.slane %v648, %v659
    %v661 = vlaneseq
    %v662 = vshrl.u32 %v661, 7
    %v663 = vsub.s32 1, %v662
    %v664 = vrot.slane %v648, %v663
    %v669 = vmul.f32 %v652, %v40
    %v670 = vmul.f32 %v656, %v44
    %v671 = vmul.f32 %v660, %v41
    %v672 = vmul.f32 %v664, %v45
    %v677 = vcombine.low %v669, %v670
    %v678 = vcombine.low %v671, %v672
    %681 = vst [vmem:[#allocation7] sm:$0xff] %v677
    %682 = vst [vmem:[#allocation7 + $0x8] sm:$0xff] %v678
    // Predicated region
    $region18: #{tpu_custom_call.1} parent=1 // pred_check
      _
    $region19: #{tpu_custom_call.1} parent=1 // pred_check_branch
      %684 = sbr.rel (0) target = $region21
    $region20: #{tpu_custom_call.1} parent=1 // pred_region
      %s686 = ssub.s32 256, 256
      %687 = vsyncadd [#allocation4], %s686
      %s688 = sshll.u32 [#allocation7], 4
      %s689 = int_to_ptr.vmem [resolvable:$true] %s688
      %694 = dma.vmem_to_hbm [thread:$0]  %s689, 256, %s2, [#allocation4], 128, 128, 8
    $region21: #{tpu_custom_call.1} parent=1 // pred_fallthru
      _
    // Predicated region
    $region22: #{tpu_custom_call.1} parent=1 // pred_check
      _
    $region23: #{tpu_custom_call.1} parent=1 // pred_check_branch
      %696 = sbr.rel (0) target = $region25
    $region24: #{tpu_custom_call.1} parent=1 // pred_region
      %697 = dma.done [#allocation4], 256
    $region25: #{tpu_custom_call.1} parent=1 // pred_fallthru
      _
    %698 = vsyncpa [#allocation3], 1
    %699 = vsyncpa [#allocation6], 1
    %700 = vsyncpa [#allocation4], 1

</llo_original>
